<compile_context>
chip_gen: v7x
topology: tpu7x:2x2x1
jax: 0.10.0
libtpu: 0.0.40
codegen_flags: <defaults>
</compile_context>

<pallas_src>
import functools

import jax
import jax.numpy as jnp
from jax import lax
from jax.experimental import pallas as pl
from jax.experimental.pallas import tpu as pltpu

EPS = 1e-5        # PyTorch GroupNorm default eps
SMALL_C = 32      # below this, do the channel mix on the VPU instead of the MXU


# ----------------------------------------------------------------------------
# helpers
# ----------------------------------------------------------------------------
def _vmem_capacity_bytes():
    try:
        cap = int(getattr(pltpu.get_tpu_info(), "vmem_capacity_bytes", 0))
        if cap > 0:
            return cap
    except Exception:
        pass
    return 64 << 20  # conservative (v7x per-core)


def _choose_tile_l(L, C, itemsize, target_block_bytes):
    """Largest multiple-of-128 divisor of L with C*tile*itemsize <= target."""
    cap_elems = max(128, target_block_bytes // max(1, C * itemsize))
    if L <= cap_elems:
        return L
    best, t = 128, 128
    while t <= cap_elems:
        if L % t == 0:
            best = t
        t += 128
    return best


def _channel_mix(w, x_raw, xf, c, small_c, mxu_dtype):
    """y[o, l] = sum_c w[o, c] * x[c, l]  (f32 result)."""
    if small_c:
        # Tiny contraction: C unrolled VPU FMAs beat padding the MXU to 128/256.
        y = w[:, 0:1] * xf[0:1, :]
        for cc in range(1, c):
            y = y + w[:, cc:cc + 1] * xf[cc:cc + 1, :]
        return y
    return jnp.dot(w, x_raw.astype(mxu_dtype), preferred_element_type=jnp.float32)


# ----------------------------------------------------------------------------
# fused single-pass kernel: stats + GroupNorm + 1x1 conv from one resident block
# ----------------------------------------------------------------------------
def _fused_kernel(x_ref, wg_ref, u_ref, v_ref, o_ref, *, count, c, small_c, mxu_dtype):
    x_raw = x_ref[...]                         # (C, Lp)
    xf = x_raw.astype(jnp.float32)
    # Per-sample stats in one sweep (padded lanes are zeros -> contribute 0).
    s = jnp.sum(xf)
    ss = jnp.sum(xf * xf)
    mean = s * (1.0 / count)
    var = jnp.maximum(ss * (1.0 / count) - mean * mean, 0.0)
    inv = lax.rsqrt(var + EPS)
    # Channel mix with gamma folded into the weight columns.
    mix = _channel_mix(wg_ref[...], x_raw, xf, c, small_c, mxu_dtype)   # (C, Lp) f32
    bias = u_ref[...] - (mean * inv) * v_ref[...]                       # (C, 1)
    o_ref[...] = (inv * mix + bias).astype(o_ref.dtype)


# ----------------------------------------------------------------------------
# fallback pass 1: per-sample sum / sum-of-squares, accumulated over L tiles
# ----------------------------------------------------------------------------
def _stats_kernel(x_ref, s_ref):
    @pl.when(pl.program_id(1) == 0)
    def _():
        s_ref[...] = jnp.zeros_like(s_ref)

    x = x_ref[...].astype(jnp.float32)         # (C, tileL) -- fused single sweep
    s_ref[0:1, :] += jnp.full((1, 128), jnp.sum(x), jnp.float32)
    s_ref[1:2, :] += jnp.full((1, 128), jnp.sum(x * x), jnp.float32)


# ----------------------------------------------------------------------------
# fallback pass 2: pure per-sample channel mix (+ bias); norm folded into W/bias
# ----------------------------------------------------------------------------
def _apply_kernel(x_ref, w_ref, b_ref, o_ref, *, c, small_c, mxu_dtype):
    x_raw = x_ref[...]
    xf = x_raw.astype(jnp.float32) if small_c else None
    y = _channel_mix(w_ref[...], x_raw, xf, c, small_c, mxu_dtype)
    o_ref[...] = (y + b_ref[...]).astype(o_ref.dtype)


# ----------------------------------------------------------------------------
# wrapper
# ----------------------------------------------------------------------------
def prenorm_conv1x1(x_nchw, gamma, beta, conv_w, conv_b, *, force_two_pass=False):
    """PreNorm(dim, Conv2d(dim, dim, 1)): GroupNorm(1, C) then 1x1 conv."""
    N, C, H, W = x_nchw.shape
    L = H * W
    Lp = ((L + 127) // 128) * 128              # lane-dense padding
    x = x_nchw.reshape(N, C, L)                # free reshape (no transpose)
    if Lp != L:
        x = jnp.pad(x, ((0, 0), (0, 0), (0, Lp - L)))

    itemsize = int(jnp.dtype(x.dtype).itemsize)
    mxu_dtype = jnp.bfloat16 if x.dtype == jnp.bfloat16 else jnp.float32
    small_c = C < SMALL_C

    gamma_f = gamma.reshape(C).astype(jnp.float32)
    beta_f = beta.reshape(C).astype(jnp.float32)
    w_f = conv_w.reshape(C, C).astype(jnp.float32)
    cb_f = conv_b.reshape(C).astype(jnp.float32)

    # Fold GroupNorm affine into the conv:
    #   y = inv * (Wg @ x) + u - (mean*inv) * v
    wg = w_f * gamma_f[None, :]                              # (C, C) col-scaled
    u = (w_f @ beta_f + cb_f).reshape(C, 1)                  # (C, 1)
    v = (w_f @ gamma_f).reshape(C, 1)                        # (C, 1)

    cap = _vmem_capacity_bytes()
    small_vmem = cap <= (96 << 20)                            # v7x-class (64 MiB)
    budget = (28 << 20) if small_vmem else (48 << 20)

    count = float(C * L)                                      # actual (unpadded) count

    # Rough fused working set: 2x double-buffered in + out blocks, plus in-kernel
    # f32 intermediates, plus resident params and slack.
    fused_live = (4 * C * Lp * itemsize) + (3 * C * Lp * 4) + (8 * C * C) + (1 << 20)
    use_fused = (not force_two_pass) and (fused_live <= budget - (4 << 20))

    if use_fused:
        wg_k = wg.astype(jnp.float32 if small_c else mxu_dtype)
        kernel = functools.partial(_fused_kernel, count=count, c=C,
                                   small_c=small_c, mxu_dtype=mxu_dtype)
        out = pl.pallas_call(
            kernel,
            out_shape=jax.ShapeDtypeStruct((N, C, Lp), x.dtype),
            grid_spec=pltpu.PrefetchScalarGridSpec(
                num_scalar_prefetch=0,
                grid=(N,),
                in_specs=[
                    pl.BlockSpec((pl.Squeezed(), C, Lp), lambda n: (n, 0, 0)),
                    # Grid-invariant residents (constant block index):
                    pl.BlockSpec((C, C), lambda n: (0, 0)),
                    pl.BlockSpec((C, 1), lambda n: (0, 0)),
                    pl.BlockSpec((C, 1), lambda n: (0, 0)),
                ],
                out_specs=pl.BlockSpec((pl.Squeezed(), C, Lp), lambda n: (n, 0, 0)),
            ),
            compiler_params=pltpu.CompilerParams(
                dimension_semantics=("parallel",),
                vmem_limit_bytes=int(budget)),
        )(x, wg_k, u, v)
    else:
        # ---- fallback: two passes over HBM ---------------------------------
        target_block = (3 << 20) if small_vmem else (6 << 20)
        if itemsize < 4:
            target_block //= 2                 # keep f32 in-kernel temps in budget
        tile_l = _choose_tile_l(Lp, C, itemsize, target_block)
        n_lt = Lp // tile_l

        stats = pl.pallas_call(
            _stats_kernel,
            out_shape=jax.ShapeDtypeStruct((N, 2, 128), jnp.float32),
            grid_spec=pltpu.PrefetchScalarGridSpec(
                num_scalar_prefetch=0,
                grid=(N, n_lt),
                in_specs=[pl.BlockSpec((pl.Squeezed(), C, tile_l),
                                       lambda n, l: (n, 0, l))],
                out_specs=pl.BlockSpec((pl.Squeezed(), 2, 128),
                                       lambda n, l: (n, 0, 0)),
            ),
            compiler_params=pltpu.CompilerParams(
                dimension_semantics=("parallel", "arbitrary"),
                vmem_limit_bytes=int(budget)),
        )(x)

        mean = stats[:, 0, 0] / count                                    # (N,)
        var = jnp.maximum(stats[:, 1, 0] / count - mean * mean, 0.0)
        inv = lax.rsqrt(var + EPS)                                       # (N,)

        # Per-sample folded weights / bias: y = W_n @ x + b_n.
        w_n = inv[:, None, None] * wg[None, :, :]                        # (N, C, C)
        b_n = u[None, :, :] - (mean * inv)[:, None, None] * v[None, :, :]  # (N, C, 1)
        w_k = w_n.astype(jnp.float32 if small_c else mxu_dtype)
        b_k = b_n.astype(jnp.float32)

        kernel = functools.partial(_apply_kernel, c=C,
                                   small_c=small_c, mxu_dtype=mxu_dtype)
        out = pl.pallas_call(
            kernel,
            out_shape=jax.ShapeDtypeStruct((N, C, Lp), x.dtype),
            grid_spec=pltpu.PrefetchScalarGridSpec(
                num_scalar_prefetch=0,
                grid=(N, n_lt),
                in_specs=[
                    pl.BlockSpec((pl.Squeezed(), C, tile_l), lambda n, l: (n, 0, l)),
                    pl.BlockSpec((pl.Squeezed(), C, C), lambda n, l: (n, 0, 0)),
                    pl.BlockSpec((pl.Squeezed(), C, 1), lambda n, l: (n, 0, 0)),
                ],
                out_specs=pl.BlockSpec((pl.Squeezed(), C, tile_l),
                                       lambda n, l: (n, 0, l)),
            ),
            compiler_params=pltpu.CompilerParams(
                dimension_semantics=("parallel", "parallel"),
                vmem_limit_bytes=int(budget)),
        )(x, w_k, b_k)

    if Lp != L:
        out = out[:, :, :L]
    return out.reshape(N, C, H, W)             # free reshape back to NCHW


# ----------------------------------------------------------------------------
# reference (pure jnp)
# ----------------------------------------------------------------------------
def prenorm_reference(x_nchw, gamma, beta, conv_w, conv_b):
    N, C, H, W = x_nchw.shape
    xf = x_nchw.astype(jnp.float32).reshape(N, -1)
    mean = jnp.mean(xf, axis=1, keepdims=True)
    var = jnp.mean((xf - mean) ** 2, axis=1, keepdims=True)
    xn = ((xf - mean) / jnp.sqrt(var + EPS)).reshape(N, C, H, W)
    xn = xn * gamma.reshape(1, C, 1, 1) + beta.reshape(1, C, 1, 1)
    w = conv_w.reshape(C, C)
    y = jnp.einsum("oc,nchw->nohw", w, xn) + conv_b.reshape(1, C, 1, 1)
    return y.astype(x_nchw.dtype)


if __name__ == "__main__":
    key = jax.random.PRNGKey(0)
    k_x, k_g, k_b, k_w, k_c, k_x2, k_w2 = jax.random.split(key, 7)

    # Primary case: PreNorm(dim=4) + 1x1 conv on a (2, 4, 16, 16) feature map.
    N, C, H, W = 2, 4, 16, 16
    x = jax.random.normal(k_x, (N, C, H, W), dtype=jnp.float32)
    gamma = 1.0 + 0.1 * jax.random.normal(k_g, (C,), dtype=jnp.float32)
    beta = 0.1 * jax.random.normal(k_b, (C,), dtype=jnp.float32)
    conv_w = 0.2 * jax.random.normal(k_w, (C, C, 1, 1), dtype=jnp.float32)
    conv_b = 0.1 * jax.random.normal(k_c, (C,), dtype=jnp.float32)

    ref = prenorm_reference(x, gamma, beta, conv_w, conv_b)

    out = jax.block_until_ready(prenorm_conv1x1(x, gamma, beta, conv_w, conv_b))
    assert out.shape == (N, C, H, W)
    assert jnp.allclose(out, ref, atol=1e-4, rtol=1e-4), "fused path mismatch"

    # Exercise the two-pass fallback (kept for samples larger than VMEM).
    out2 = jax.block_until_ready(
        prenorm_conv1x1(x, gamma, beta, conv_w, conv_b, force_two_pass=True))
    assert jnp.allclose(out2, ref, atol=1e-4, rtol=1e-4), "two-pass path mismatch"

    # Wider-channel + non-multiple-of-128 spatial case (MXU mix + lane padding).
    C2, H2, W2 = 32, 10, 10
    x2 = jax.random.normal(k_x2, (N, C2, H2, W2), dtype=jnp.float32)
    g2 = jnp.ones((C2,), jnp.float32)
    b2 = jnp.zeros((C2,), jnp.float32)
    w2 = 0.1 * jax.random.normal(k_w2, (C2, C2, 1, 1), dtype=jnp.float32)
    cb2 = jnp.zeros((C2,), jnp.float32)
    ref3 = prenorm_reference(x2, g2, b2, w2, cb2)
    out3 = jax.block_until_ready(prenorm_conv1x1(x2, g2, b2, w2, cb2))
    assert jnp.allclose(out3, ref3, atol=1e-4, rtol=1e-4), "MXU/pad path mismatch"

    print("KERNEL_OK")
</pallas_src>

<mosaic_0001>
module attributes {stable_mosaic.version = 11 : i64} {
  func.func @_fused_kernel(%arg0: i32, %arg1: memref<1x4x256xf32, #tpu.memory_space<vmem>>, %arg2: memref<4x4xf32, #tpu.memory_space<vmem>>, %arg3: memref<4x1xf32, #tpu.memory_space<vmem>>, %arg4: memref<4x1xf32, #tpu.memory_space<vmem>>, %arg5: memref<1x4x256xf32, #tpu.memory_space<vmem>>) attributes {dimension_semantics = [#tpu.dimension_semantics<parallel>], iteration_bounds = array<i64: 2>, scalar_prefetch = 0 : i64, scratch_operands = 0 : i64, tpu.core_type = #tpu.core_type<tc>, window_params = [{transform_indices = @transform_0, window_bounds = array<i64: 1, 4, 256>}, {pipeline_mode = #tpu.pipeline_mode<synchronous>, transform_indices = @transform_1, window_bounds = array<i64: 4, 4>}, {pipeline_mode = #tpu.pipeline_mode<synchronous>, transform_indices = @transform_2, window_bounds = array<i64: 4, 1>}, {pipeline_mode = #tpu.pipeline_mode<synchronous>, transform_indices = @transform_3, window_bounds = array<i64: 4, 1>}, {transform_indices = @transform_4, window_bounds = array<i64: 1, 4, 256>}]} {
    %c0 = arith.constant 0 : index
    %c0_0 = arith.constant 0 : index
    %c0_1 = arith.constant 0 : index
    %0 = vector.load %arg1[%c0, %c0_0, %c0_1] : memref<1x4x256xf32, #tpu.memory_space<vmem>>, vector<1x4x256xf32>
    %1 = vector.shape_cast %0 : vector<1x4x256xf32> to vector<4x256xf32>
    %2 = vector.shape_cast %1 : vector<4x256xf32> to vector<1x4x256xf32>
    %cst = arith.constant dense<0.000000e+00> : vector<1xf32>
    %3 = vector.multi_reduction <add>, %2, %cst [1, 2] : vector<1x4x256xf32> to vector<1xf32>
    %4 = vector.shape_cast %3 : vector<1xf32> to vector<1x1x1xf32>
    %5 = vector.extract %4[0, 0, 0] : f32 from vector<1x1x1xf32>
    %6 = arith.mulf %1, %1 : vector<4x256xf32>
    %7 = vector.shape_cast %6 : vector<4x256xf32> to vector<1x4x256xf32>
    %cst_2 = arith.constant dense<0.000000e+00> : vector<1xf32>
    %8 = vector.multi_reduction <add>, %7, %cst_2 [1, 2] : vector<1x4x256xf32> to vector<1xf32>
    %9 = vector.shape_cast %8 : vector<1xf32> to vector<1x1x1xf32>
    %10 = vector.extract %9[0, 0, 0] : f32 from vector<1x1x1xf32>
    %cst_3 = arith.constant 9.765625E-4 : f32
    %11 = arith.mulf %5, %cst_3 : f32
    %cst_4 = arith.constant 9.765625E-4 : f32
    %12 = arith.mulf %10, %cst_4 : f32
    %13 = arith.mulf %11, %11 : f32
    %14 = arith.subf %12, %13 : f32
    %cst_5 = arith.constant 0.000000e+00 : f32
    %15 = arith.maximumf %14, %cst_5 : f32
    %cst_6 = arith.constant 9.99999974E-6 : f32
    %16 = arith.addf %15, %cst_6 : f32
    %17 = math.rsqrt %16 : f32
    %c0_7 = arith.constant 0 : index
    %c0_8 = arith.constant 0 : index
    %18 = vector.load %arg2[%c0_7, %c0_8] : memref<4x4xf32, #tpu.memory_space<vmem>>, vector<4x4xf32>
    %19 = vector.extract_strided_slice %18 {offsets = [0, 0], sizes = [4, 1], strides = [1, 1]} : vector<4x4xf32> to vector<4x1xf32>
    %20 = vector.extract_strided_slice %1 {offsets = [0, 0], sizes = [1, 256], strides = [1, 1]} : vector<4x256xf32> to vector<1x256xf32>
    %21 = vector.broadcast %19 : vector<4x1xf32> to vector<4x256xf32>
    %22 = vector.broadcast %20 : vector<1x256xf32> to vector<4x256xf32>
    %23 = arith.mulf %21, %22 : vector<4x256xf32>
    %24 = vector.extract_strided_slice %18 {offsets = [0, 1], sizes = [4, 1], strides = [1, 1]} : vector<4x4xf32> to vector<4x1xf32>
    %25 = vector.extract_strided_slice %1 {offsets = [1, 0], sizes = [1, 256], strides = [1, 1]} : vector<4x256xf32> to vector<1x256xf32>
    %26 = vector.broadcast %24 : vector<4x1xf32> to vector<4x256xf32>
    %27 = vector.broadcast %25 : vector<1x256xf32> to vector<4x256xf32>
    %28 = arith.mulf %26, %27 : vector<4x256xf32>
    %29 = arith.addf %23, %28 : vector<4x256xf32>
    %30 = vector.extract_strided_slice %18 {offsets = [0, 2], sizes = [4, 1], strides = [1, 1]} : vector<4x4xf32> to vector<4x1xf32>
    %31 = vector.extract_strided_slice %1 {offsets = [2, 0], sizes = [1, 256], strides = [1, 1]} : vector<4x256xf32> to vector<1x256xf32>
    %32 = vector.broadcast %30 : vector<4x1xf32> to vector<4x256xf32>
    %33 = vector.broadcast %31 : vector<1x256xf32> to vector<4x256xf32>
    %34 = arith.mulf %32, %33 : vector<4x256xf32>
    %35 = arith.addf %29, %34 : vector<4x256xf32>
    %36 = vector.extract_strided_slice %18 {offsets = [0, 3], sizes = [4, 1], strides = [1, 1]} : vector<4x4xf32> to vector<4x1xf32>
    %37 = vector.extract_strided_slice %1 {offsets = [3, 0], sizes = [1, 256], strides = [1, 1]} : vector<4x256xf32> to vector<1x256xf32>
    %38 = vector.broadcast %36 : vector<4x1xf32> to vector<4x256xf32>
    %39 = vector.broadcast %37 : vector<1x256xf32> to vector<4x256xf32>
    %40 = arith.mulf %38, %39 : vector<4x256xf32>
    %41 = arith.addf %35, %40 : vector<4x256xf32>
    %c0_9 = arith.constant 0 : index
    %c0_10 = arith.constant 0 : index
    %42 = vector.load %arg3[%c0_9, %c0_10] : memref<4x1xf32, #tpu.memory_space<vmem>>, vector<4x1xf32>
    %43 = arith.mulf %11, %17 : f32
    %c0_11 = arith.constant 0 : index
    %c0_12 = arith.constant 0 : index
    %44 = vector.load %arg4[%c0_11, %c0_12] : memref<4x1xf32, #tpu.memory_space<vmem>>, vector<4x1xf32>
    %45 = vector.broadcast %43 : f32 to vector<4x1xf32>
    %46 = arith.mulf %45, %44 : vector<4x1xf32>
    %47 = arith.subf %42, %46 : vector<4x1xf32>
    %48 = vector.broadcast %17 : f32 to vector<4x256xf32>
    %49 = arith.mulf %48, %41 : vector<4x256xf32>
    %50 = vector.broadcast %47 : vector<4x1xf32> to vector<4x256xf32>
    %51 = arith.addf %49, %50 : vector<4x256xf32>
    %c0_13 = arith.constant 0 : index
    %c0_14 = arith.constant 0 : index
    %c0_15 = arith.constant 0 : index
    %52 = vector.load %arg5[%c0_13, %c0_14, %c0_15] : memref<1x4x256xf32, #tpu.memory_space<vmem>>, vector<1x4x256xf32>
    %53 = vector.shape_cast %52 : vector<1x4x256xf32> to vector<4x256xf32>
    %54 = vector.shape_cast %51 : vector<4x256xf32> to vector<1x4x256xf32>
    tpu.vector_store %arg5[%c0_13, %c0_14, %c0_15], %54 {strides = array<i32>} : memref<1x4x256xf32, #tpu.memory_space<vmem>>, vector<1x4x256xf32>,
    return
  }
  func.func @transform_0(%arg0: i32) -> (i32, i32, i32) {
    %c0_i32 = arith.constant 0 : i32
    %c0_i32_0 = arith.constant 0 : i32
    %c0_i32_1 = arith.constant 0 : i32
    return %arg0, %c0_i32, %c0_i32_0 : i32, i32, i32
  }
  func.func @transform_1(%arg0: i32) -> (i32, i32) {
    %c0_i32 = arith.constant 0 : i32
    %c0_i32_0 = arith.constant 0 : i32
    %c0_i32_1 = arith.constant 0 : i32
    return %c0_i32, %c0_i32_0 : i32, i32
  }
  func.func @transform_2(%arg0: i32) -> (i32, i32) {
    %c0_i32 = arith.constant 0 : i32
    %c0_i32_0 = arith.constant 0 : i32
    %c0_i32_1 = arith.constant 0 : i32
    return %c0_i32, %c0_i32_0 : i32, i32
  }
  func.func @transform_3(%arg0: i32) -> (i32, i32) {
    %c0_i32 = arith.constant 0 : i32
    %c0_i32_0 = arith.constant 0 : i32
    %c0_i32_1 = arith.constant 0 : i32
    return %c0_i32, %c0_i32_0 : i32, i32
  }
  func.func @transform_4(%arg0: i32) -> (i32, i32, i32) {
    %c0_i32 = arith.constant 0 : i32
    %c0_i32_0 = arith.constant 0 : i32
    %c0_i32_1 = arith.constant 0 : i32
    return %arg0, %c0_i32, %c0_i32_0 : i32, i32, i32
  }
}

</mosaic_0001>

<llo_original>
// kernel: tpu_custom_call.1
$region0: #{tpu_custom_call.1}
  #allocation0 [shape = 'u32[]', space=smem, size = 0x4, offset = 0x4, fixed_abs, tag = 'smem constant byte address 0x4 - core index']
  #allocation1 [shape = 'u32[144,128]{1,0:T(1,128)}', space=vmem, size = 0x12000, scoped, tag = 'internal scratch']
  %s0 = inlined_call_operand.hbm [shape: f32[2,4,256], index: 0, kind: input, shape index: {}]
  %s1 = inlined_call_operand.vmem [shape: f32[4,4], index: 1, kind: input, shape index: {}]
  %s2 = inlined_call_operand.vmem [shape: f32[4,1], index: 2, kind: input, shape index: {}]
  %s3 = inlined_call_operand.vmem [shape: f32[4,1], index: 3, kind: input, shape index: {}]
  %s4 = inlined_call_operand.hbm [shape: f32[2,4,256], index: 4, kind: output, shape index: {}]
  %s5 = sld [smem:[#allocation0]]
  $region53: #{tpu_custom_call.1} parent=0
    _
  %s7 = ssub.s32 1, %s5
  %s8 = scalar_select 0, %s7, %s5
  $region1: #{tpu_custom_call.1} parent=0
    #allocation2 [shape = 'u8[8192]{0}', space=vmem, size = 0x2000, scoped, tag = 'input window, operand 0']
    #allocation3 [shape = 's32[2]{0}', space=sflag, size = 0x8, scoped, tag = 'scoped memory for tpu_custom_call.1']
    #allocation4 [shape = 's32[2]{0}', space=sflag, size = 0x8, scoped, tag = 'scoped memory for tpu_custom_call.1']
    #allocation5 [shape = 'u8[8192]{0}', space=vmem, size = 0x2000, scoped, tag = 'output window, operand 0']
    %9 = vsyncpa [#allocation3], 0
    %s10 = scalar_lea.sflag [#allocation3], 1
    %11 = vsyncpa %s10, 0
    %12 = vsyncpa [#allocation4], 0
    %s13 = scalar_lea.sflag [#allocation4], 1
    %14 = vsyncpa %s13, 0
    loop: start=0, step=1, limit=4
    $region2: #{tpu_custom_call.1} parent=1 // loop_pre_header
      _
    $region3: #{tpu_custom_call.1} parent=1 // loop_header
      %s16 = sphi 0, %s20
      %p17 = scmp.ge.s32.totalorder %s16, 4
      %s26 = sphi 0, %s28
      %s29 = sphi 0, %s26
      %s30 = sphi 0, %s29
      %s46 = sphi 0, %s30
      %s50 = sphi 0, %s50
      %s52 = sphi 0, %s50
      %s53 = sphi 0, %s52
      %s67 = sphi 0, %s53
      %s71 = sphi 0, %s71
      %s73 = sphi 0, %s71
      %s74 = sphi 0, %s73
      %s88 = sphi 0, %s74
      %s92 = sphi 0, %s92
      %s94 = sphi 0, %s92
      %s95 = sphi 0, %s94
      %s109 = sphi 0, %s95
      %s115 = sphi 0, %s117
      %s118 = sphi 0, %s115
      %s119 = sphi 0, %s118
      %s135 = sphi 0, %s119
    $region4: #{tpu_custom_call.1} parent=1 // loop_header_branch
      %19 = sbr.rel (%p17) target = $region8
    $region5: #{tpu_custom_call.1} parent=1 // loop_body
      %s21 = ssub.s32 %s16, 1
      %s22 = ssub.s32 %s16, 2
      %s23 = sadd.s32 %s16, 1
      %s24 = ssub.s32 %s16, %s23
      %p25 = scmp.eq.s32.totalorder %s24, 0
      %s27 = sadd.s32 %s26, 1
      %s28 = scalar_select %p25, %s26, %s27
      %p31 = pneg %p25
      %p32 = scmp.eq.s32.totalorder %s16, 1
      %p33 = por %p31, %p32
      %p34 = scmp.ne.s32.totalorder %s26, %s29
      %p35 = scmp.eq.s32.totalorder %s16, 0
      %p36 = por %p34, %p35
      %p37 = scmp.ne.s32.totalorder %s26, %s29
      %p38 = scmp.eq.s32.totalorder %s21, 1
      %p39 = por %p37, %p38
      %p40 = scmp.ne.s32.totalorder %s29, %s30
      %p41 = scmp.eq.s32.totalorder %s21, 0
      %p42 = por %p40, %p41
      %p43 = scmp.ne.s32.totalorder %s29, %s30
      %p44 = scmp.eq.s32.totalorder %s22, 1
      %p45 = por %p43, %p44
      %p47 = scmp.ne.s32.totalorder %s30, %s46
      %p48 = scmp.eq.s32.totalorder %s22, 0
      %p49 = por %p47, %p48
      %s51 = sadd.s32 %s50, 1
      %p54 = scmp.eq.s32.totalorder %s16, 1
      %p55 = scmp.ne.s32.totalorder %s50, %s52
      %p56 = scmp.eq.s32.totalorder %s16, 0
      %p57 = por %p55, %p56
      %p58 = scmp.ne.s32.totalorder %s50, %s52
      %p59 = scmp.eq.s32.totalorder %s21, 1
      %p60 = por %p58, %p59
      %p61 = scmp.ne.s32.totalorder %s52, %s53
      %p62 = scmp.eq.s32.totalorder %s21, 0
      %p63 = por %p61, %p62
      %p64 = scmp.ne.s32.totalorder %s52, %s53
      %p65 = scmp.eq.s32.totalorder %s22, 1
      %p66 = por %p64, %p65
      %p68 = scmp.ne.s32.totalorder %s53, %s67
      %p69 = scmp.eq.s32.totalorder %s22, 0
      %p70 = por %p68, %p69
      %s72 = sadd.s32 %s71, 1
      %p75 = scmp.eq.s32.totalorder %s16, 1
      %p76 = scmp.ne.s32.totalorder %s71, %s73
      %p77 = scmp.eq.s32.totalorder %s16, 0
      %p78 = por %p76, %p77
      %p79 = scmp.ne.s32.totalorder %s71, %s73
      %p80 = scmp.eq.s32.totalorder %s21, 1
      %p81 = por %p79, %p80
      %p82 = scmp.ne.s32.totalorder %s73, %s74
      %p83 = scmp.eq.s32.totalorder %s21, 0
      %p84 = por %p82, %p83
      %p85 = scmp.ne.s32.totalorder %s73, %s74
      %p86 = scmp.eq.s32.totalorder %s22, 1
      %p87 = por %p85, %p86
      %p89 = scmp.ne.s32.totalorder %s74, %s88
      %p90 = scmp.eq.s32.totalorder %s22, 0
      %p91 = por %p89, %p90
      %s93 = sadd.s32 %s92, 1
      %p96 = scmp.eq.s32.totalorder %s16, 1
      %p97 = scmp.ne.s32.totalorder %s92, %s94
      %p98 = scmp.eq.s32.totalorder %s16, 0
      %p99 = por %p97, %p98
      %p100 = scmp.ne.s32.totalorder %s92, %s94
      %p101 = scmp.eq.s32.totalorder %s21, 1
      %p102 = por %p100, %p101
      %p103 = scmp.ne.s32.totalorder %s94, %s95
      %p104 = scmp.eq.s32.totalorder %s21, 0
      %p105 = por %p103, %p104
      %p106 = scmp.ne.s32.totalorder %s94, %s95
      %p107 = scmp.eq.s32.totalorder %s22, 1
      %p108 = por %p106, %p107
      %p110 = scmp.ne.s32.totalorder %s95, %s109
      %p111 = scmp.eq.s32.totalorder %s22, 0
      %p112 = por %p110, %p111
      %s113 = ssub.s32 %s16, %s23
      %p114 = scmp.eq.s32.totalorder %s113, 0
      %s116 = sadd.s32 %s115, 1
      %s117 = scalar_select %p114, %s115, %s116
      %p120 = pneg %p114
      %p121 = scmp.eq.s32.totalorder %s16, 1
      %p122 = por %p120, %p121
      %p123 = scmp.ne.s32.totalorder %s115, %s118
      %p124 = scmp.eq.s32.totalorder %s16, 0
      %p125 = por %p123, %p124
      %p126 = scmp.ne.s32.totalorder %s115, %s118
      %p127 = scmp.eq.s32.totalorder %s21, 1
      %p128 = por %p126, %p127
      %p129 = scmp.ne.s32.totalorder %s118, %s119
      %p130 = scmp.eq.s32.totalorder %s21, 0
      %p131 = por %p129, %p130
      %p132 = scmp.ne.s32.totalorder %s118, %s119
      %p133 = scmp.eq.s32.totalorder %s22, 1
      %p134 = por %p132, %p133
      %p136 = scmp.ne.s32.totalorder %s119, %s135
      %p137 = scmp.eq.s32.totalorder %s22, 0
      %p138 = por %p136, %p137
      %p139 = scmp.le.s32.totalorder 1, %s16
      %p140 = scmp.lt.s32.totalorder %s16, 3
      %p141 = pnand %p139, %p140
      %p142 = pneg %p141
      // Predicated region
      $region9: #{tpu_custom_call.1} parent=5 // pred_check
        _
      $region10: #{tpu_custom_call.1} parent=5 // pred_check_branch
        %144 = sbr.rel (%p141) target = $region12
      $region11: #{tpu_custom_call.1} parent=5 // pred_region
        %s145 = ssub.s32 %s16, 1
        // Predicated region
        $region13: #{tpu_custom_call.1} parent=11 // pred_check
          %p146 = pneg %p63
        $region14: #{tpu_custom_call.1} parent=11 // pred_check_branch
          %148 = sbr.rel (%p146) target = $region16
        $region15: #{tpu_custom_call.1} parent=11 // pred_region
          _
        $region16: #{tpu_custom_call.1} parent=11 // pred_fallthru
          _
        // Predicated region
        $region17: #{tpu_custom_call.1} parent=11 // pred_check
          %p149 = pneg %p84
        $region18: #{tpu_custom_call.1} parent=11 // pred_check_branch
          %151 = sbr.rel (%p149) target = $region20
        $region19: #{tpu_custom_call.1} parent=11 // pred_region
          _
        $region20: #{tpu_custom_call.1} parent=11 // pred_fallthru
          _
        // Predicated region
        $region21: #{tpu_custom_call.1} parent=11 // pred_check
          %p152 = pneg %p105
        $region22: #{tpu_custom_call.1} parent=11 // pred_check_branch
          %154 = sbr.rel (%p152) target = $region24
        $region23: #{tpu_custom_call.1} parent=11 // pred_region
          _
        $region24: #{tpu_custom_call.1} parent=11 // pred_fallthru
          _
      $region12: #{tpu_custom_call.1} parent=5 // pred_fallthru
        _
      %p155 = scmp.lt.s32.totalorder %s16, 2
      // Predicated region
      $region25: #{tpu_custom_call.1} parent=5 // pred_check
        %p156 = pneg %p155
      $region26: #{tpu_custom_call.1} parent=5 // pred_check_branch
        %158 = sbr.rel (%p156) target = $region28
      $region27: #{tpu_custom_call.1} parent=5 // pred_region
        // Predicated region
        $region29: #{tpu_custom_call.1} parent=27 // pred_check
          %p159 = pneg %p36
        $region30: #{tpu_custom_call.1} parent=27 // pred_check_branch
          %161 = sbr.rel (%p159) target = $region32
        $region31: #{tpu_custom_call.1} parent=27 // pred_region
          %s162 = sand.u32 %s26, 1
          %s163 = scalar_lea.sflag [#allocation3], %s162
          %s164 = sand.u32 %s26, 1
          %s165 = smul.addr %s164, 8
          %s166 = scalar_lea.vmem [#allocation2], %s165
          %s168 = ssub.s32 128, 128
          %169 = vsyncadd %s163, %s168
          %s170 = smul.addr %s16, 2
          %s171 = smul.addr %s170, 64
          %s172 = scalar_lea.hbm %s0, %s171
          %s174 = sshll.u32 %s166, 4
          %s175 = int_to_ptr.vmem [resolvable:$true] %s174
          %177 = dma.hbm_to_vmem [thread:$0]  %s172, 128, %s175, %s163
        $region32: #{tpu_custom_call.1} parent=27 // pred_fallthru
          _
      $region28: #{tpu_custom_call.1} parent=5 // pred_fallthru
        _
      %p178 = scmp.le.s32.totalorder 1, %s16
      %p179 = scmp.lt.s32.totalorder %s16, 3
      %p180 = pnand %p178, %p179
      %p181 = pneg %p180
      // Predicated region
      $region33: #{tpu_custom_call.1} parent=5 // pred_check
        _
      $region34: #{tpu_custom_call.1} parent=5 // pred_check_branch
        %183 = sbr.rel (%p180) target = $region36
      $region35: #{tpu_custom_call.1} parent=5 // pred_region
        %s184 = ssub.s32 %s16, 1
        %s185 = sand.u32 %s29, 1
        %s186 = scalar_lea.sflag [#allocation3], %s185
        %s187 = sand.u32 %s29, 1
        %s188 = smul.addr %s187, 8
        %s189 = scalar_lea.vmem [#allocation2], %s188
        // Predicated region
        $region37: #{tpu_custom_call.1} parent=35 // pred_check
          %p190 = pneg %p42
        $region38: #{tpu_custom_call.1} parent=35 // pred_check_branch
          %192 = sbr.rel (%p190) target = $region40
        $region39: #{tpu_custom_call.1} parent=35 // pred_region
          %193 = dma.done %s186, 128
        $region40: #{tpu_custom_call.1} parent=35 // pred_fallthru
          _
        %s194 = sand.u32 %s29, 1
        %s195 = scalar_lea.sflag [#allocation3], %s194
        %s196 = sand.u32 %s29, 1
        %s197 = smul.addr %s196, 8
        %s198 = scalar_lea.vmem [#allocation2], %s197
        %p199 = pneg %p42
        %p200 = pneg %p39
        %p201 = pneg %p63
        %p202 = pneg %p60
        %p203 = pneg %p84
        %p204 = pneg %p81
        %p205 = pneg %p105
        %p206 = pneg %p102
        %p207 = pneg %p131
        %p208 = pneg %p128
        %s209 = sand.u32 %s118, 1
        %s210 = scalar_lea.sflag [#allocation4], %s209
        %s211 = sand.u32 %s118, 1
        %s212 = smul.addr %s211, 8
        %s213 = scalar_lea.vmem [#allocation5], %s212
        %v214 = vld [vmem:[%s189] sm:$0xff]
        %v216 = vcombine.high %v214, %v214
        %vm218 = vcmask 1043456
        %v219 = vsel %vm218, %v214, 0.0
        %v220 = vsel %vm218, %v216, 0.0
        %v221 = vadd.f32 %v219, %v220
        %222 = vadd.xlane.f32.xlu0 %v221
        %v223 = vpop.xlane.xlu0 %222
        %v224 = vrot.slane %v223, 4
        %v225 = vadd.f32 %v223, %v224
        %v226 = vrot.slane %v225, 2
        %v227 = vadd.f32 %v225, %v226
        %v228 = vrot.slane %v227, 1
        %v229 = vadd.f32 %v227, %v228
        %s230 = vtos %v229
        %v231 = vmul.f32 %v214, %v214
        %v233 = vcombine.high %v231, %v231
        %v235 = vsel %vm218, %v231, 0.0
        %v236 = vsel %vm218, %v233, 0.0
        %v237 = vadd.f32 %v235, %v236
        %238 = vadd.xlane.f32.xlu0 %v237
        %v239 = vpop.xlane.xlu0 %238
        %v240 = vrot.slane %v239, 4
        %v241 = vadd.f32 %v239, %v240
        %v242 = vrot.slane %v241, 2
        %v243 = vadd.f32 %v241, %v242
        %v244 = vrot.slane %v243, 1
        %v245 = vadd.f32 %v243, %v244
        %s246 = vtos %v245
        %s247 = smul.f32 %s230, 0.0009765625
        %s248 = smul.f32 %s246, 0.0009765625
        %s249 = smul.f32 %s247, %s247
        %s250 = ssub.f32 %s248, %s249
        %s251 = smax.f32 %s250, 0.0
        %s252 = sadd.f32 %s251, 1e-05
        %v253 = vstv %s252
        %v254 = vrsqrt.pop %v253
        %s255 = vtos %v254
        %v256 = vld [vmem:[%s1] sm:$0xf]
        %258 = vset.pattern.permute.xlu0 0
        %259 = vperm.xlu0 %258, %v256
        %v260 = vpop.permute.xlu0 %259
        %v262 = vlaneseq
        %v263 = vshrl.u32 %v262, 7
        %v264 = vsub.s32 0, %v263
        %v265 = vrot.slane %v214, %v264
        %v266 = vlaneseq
        %v267 = vshrl.u32 %v266, 7
        %v268 = vsub.s32 4, %v267
        %v269 = vrot.slane %v214, %v268
        %v272 = vlaneseq
        %v273 = vshrl.u32 %v272, 7
        %v274 = vsub.s32 0, %v273
        %v275 = vrot.slane %v265, %v274
        %v276 = vlaneseq
        %v277 = vshrl.u32 %v276, 7
        %v278 = vsub.s32 0, %v277
        %v279 = vrot.slane %v269, %v278
        %v280 = vmul.f32 %v260, %v275
        %v281 = vmul.f32 %v260, %v279
        %282 = vset.pattern.permute.xlu0 1
        %283 = vperm.xlu0 %282, %v256
        %v284 = vpop.permute.xlu0 %283
        %v286 = vlaneseq
        %v287 = vshrl.u32 %v286, 7
        %v288 = vsub.s32 1, %v287
        %v289 = vrot.slane %v214, %v288
        %v290 = vlaneseq
        %v291 = vshrl.u32 %v290, 7
        %v292 = vsub.s32 5, %v291
        %v293 = vrot.slane %v214, %v292
        %v296 = vlaneseq
        %v297 = vshrl.u32 %v296, 7
        %v298 = vsub.s32 1, %v297
        %v299 = vrot.slane %v289, %v298
        %v300 = vlaneseq
        %v301 = vshrl.u32 %v300, 7
        %v302 = vsub.s32 1, %v301
        %v303 = vrot.slane %v293, %v302
        %v304 = vmul.f32 %v284, %v299
        %v305 = vmul.f32 %v284, %v303
        %v306 = vadd.f32 %v280, %v304
        %v307 = vadd.f32 %v281, %v305
        %308 = vset.pattern.permute.xlu0 2
        %309 = vperm.xlu0 %308, %v256
        %v310 = vpop.permute.xlu0 %309
        %v312 = vlaneseq
        %v313 = vshrl.u32 %v312, 7
        %v314 = vsub.s32 2, %v313
        %v315 = vrot.slane %v214, %v314
        %v316 = vlaneseq
        %v317 = vshrl.u32 %v316, 7
        %v318 = vsub.s32 6, %v317
        %v319 = vrot.slane %v214, %v318
        %v322 = vlaneseq
        %v323 = vshrl.u32 %v322, 7
        %v324 = vsub.s32 2, %v323
        %v325 = vrot.slane %v315, %v324
        %v326 = vlaneseq
        %v327 = vshrl.u32 %v326, 7
        %v328 = vsub.s32 2, %v327
        %v329 = vrot.slane %v319, %v328
        %v330 = vmul.f32 %v310, %v325
        %v331 = vmul.f32 %v310, %v329
        %v332 = vadd.f32 %v306, %v330
        %v333 = vadd.f32 %v307, %v331
        %334 = vset.pattern.permute.xlu0 3
        %335 = vperm.xlu0 %334, %v256
        %v336 = vpop.permute.xlu0 %335
        %v338 = vlaneseq
        %v339 = vshrl.u32 %v338, 7
        %v340 = vsub.s32 3, %v339
        %v341 = vrot.slane %v214, %v340
        %v342 = vlaneseq
        %v343 = vshrl.u32 %v342, 7
        %v344 = vsub.s32 7, %v343
        %v345 = vrot.slane %v214, %v344
        %v348 = vlaneseq
        %v349 = vshrl.u32 %v348, 7
        %v350 = vsub.s32 3, %v349
        %v351 = vrot.slane %v341, %v350
        %v352 = vlaneseq
        %v353 = vshrl.u32 %v352, 7
        %v354 = vsub.s32 3, %v353
        %v355 = vrot.slane %v345, %v354
        %v356 = vmul.f32 %v336, %v351
        %v357 = vmul.f32 %v336, %v355
        %v358 = vadd.f32 %v332, %v356
        %v359 = vadd.f32 %v333, %v357
        %v360 = vld [vmem:[%s2] sm:$0xf]
        %s361 = smul.f32 %s247, %s255
        %v362 = vld [vmem:[%s3] sm:$0xf]
        %v363 = vstv %s361
        %v364 = vmul.f32 %v363, %v362
        %v365 = vsub.f32 %v360, %v364
        %v366 = vstv %s255
        %v367 = vmul.f32 %v366, %v358
        %v368 = vmul.f32 %v366, %v359
        %370 = vset.pattern.permute.xlu0 0
        %371 = vperm.xlu0 %370, %v365
        %v372 = vpop.permute.xlu0 %371
        %v374 = vadd.f32 %v367, %v372
        %v375 = vadd.f32 %v368, %v372
        %v378 = vcombine.low %v374, %v375
        %380 = vst [vmem:[%s213] sm:$0xff] %v378
        %s381 = sand.u32 %s118, 1
        %s382 = scalar_lea.sflag [#allocation4], %s381
        %s383 = sand.u32 %s118, 1
        %s384 = smul.addr %s383, 8
        %s385 = scalar_lea.vmem [#allocation5], %s384
        // Predicated region
        $region41: #{tpu_custom_call.1} parent=35 // pred_check
          %p386 = pneg %p128
        $region42: #{tpu_custom_call.1} parent=35 // pred_check_branch
          %388 = sbr.rel (%p386) target = $region44
        $region43: #{tpu_custom_call.1} parent=35 // pred_region
          %s390 = ssub.s32 128, 128
          %391 = vsyncadd %s382, %s390
          %s392 = smul.addr %s21, 2
          %s393 = smul.addr %s392, 64
          %s394 = scalar_lea.hbm %s4, %s393
          %s396 = sshll.u32 %s385, 4
          %s397 = int_to_ptr.vmem [resolvable:$true] %s396
          %399 = dma.vmem_to_hbm [thread:$0]  %s397, 128, %s394, %s382
        $region44: #{tpu_custom_call.1} parent=35 // pred_fallthru
          _
      $region36: #{tpu_custom_call.1} parent=5 // pred_fallthru
        _
      %p400 = scmp.le.s32.totalorder 2, %s16
      // Predicated region
      $region45: #{tpu_custom_call.1} parent=5 // pred_check
        %p401 = pneg %p400
      $region46: #{tpu_custom_call.1} parent=5 // pred_check_branch
        %403 = sbr.rel (%p401) target = $region48
      $region47: #{tpu_custom_call.1} parent=5 // pred_region
        %s404 = ssub.s32 %s16, 2
        // Predicated region
        $region49: #{tpu_custom_call.1} parent=47 // pred_check
          %p405 = pneg %p134
        $region50: #{tpu_custom_call.1} parent=47 // pred_check_branch
          %407 = sbr.rel (%p405) target = $region52
        $region51: #{tpu_custom_call.1} parent=47 // pred_region
          %s408 = sand.u32 %s119, 1
          %s409 = scalar_lea.sflag [#allocation4], %s408
          %s410 = sand.u32 %s119, 1
          %s411 = smul.addr %s410, 8
          %s412 = scalar_lea.vmem [#allocation5], %s411
          %413 = dma.done %s409, 128
        $region52: #{tpu_custom_call.1} parent=47 // pred_fallthru
          _
      $region48: #{tpu_custom_call.1} parent=5 // pred_fallthru
        _
    $region6: #{tpu_custom_call.1} parent=1 // loop_footer
      %s20 = sadd.s32 1, %s16
    $region7: #{tpu_custom_call.1} parent=1 // loop_footer_branch
      %15 = sbr.rel target = $region3
    $region8: #{tpu_custom_call.1} parent=1 // loop_exit
      _
    %414 = vsyncpa [#allocation3], 1
    %s415 = scalar_lea.sflag [#allocation3], 1
    %416 = vsyncpa %s415, 1
    %417 = vsyncpa [#allocation4], 1
    %s418 = scalar_lea.sflag [#allocation4], 1
    %419 = vsyncpa %s418, 1

</llo_original>
